<compile_context>
chip_gen: v5e
topology: v5e:2x2
jax: 0.10.0
libtpu: 0.0.40
codegen_flags: <defaults>
</compile_context>

<pallas_src>
import jax
import jax.numpy as jnp
from jax.experimental import pallas as pl
from jax.experimental.pallas import tpu as pltpu


# --------------------------------------------------------------------------- #
# Kernel
# --------------------------------------------------------------------------- #
def net_kernel(xt_ref, w1t_ref, b1t_ref, wht_ref, bht_ref, out_ref):
    # Hidden layer (transposed): (H, D) @ (D, TB) -> f32 accumulate,
    # f32 bias (lane-broadcast) + ReLU epilogue.
    ht = jnp.dot(w1t_ref[...], xt_ref[...], preferred_element_type=jnp.float32)
    ht = jnp.maximum(ht + b1t_ref[...], 0.0)

    # Folded dueling head (transposed): (A_pad, H) @ (H, TB) + (A_pad, 1).
    # Head weights are f32 (exact mean-centering); cast ht to match just in case.
    ot = jnp.dot(wht_ref[...], ht.astype(wht_ref.dtype),
                 preferred_element_type=jnp.float32)
    out_ref[...] = (ot + bht_ref[...]).astype(out_ref.dtype)


# --------------------------------------------------------------------------- #
# Wrapper
# --------------------------------------------------------------------------- #
def _round_up(n, m):
    return ((n + m - 1) // m) * m


def _fold_heads_transposed(wv, bv, wa, ba, a_pad):
    """Fold value head, advantage head, biases and dueling mean into one
    transposed (a_pad, H) matrix and (a_pad, 1) bias, all in f32."""
    hidden, A = wa.shape
    ones_1a = jnp.ones((1, A), jnp.float32)
    center = jnp.eye(A, dtype=jnp.float32) - jnp.full((A, A), 1.0 / A, jnp.float32)
    w_heads = wv.astype(jnp.float32) @ ones_1a + wa.astype(jnp.float32) @ center
    b_heads = (bv + ba - jnp.mean(ba, axis=1, keepdims=True)).astype(jnp.float32)

    wht = jnp.zeros((a_pad, hidden), jnp.float32).at[:A, :].set(w_heads.T)
    bht = jnp.zeros((a_pad, 1), jnp.float32).at[:A, :].set(b_heads.T)
    return wht, bht


def _choose_batch_tile(B, batch_tile):
    """Batch tile = lane dim of the transposed tiles: multiple of 128.
    For B > 128, cap near B/2 so the grid has >= 2 parallel steps (v7x 2 TCs)."""
    if B <= 128:
        return 128
    half = _round_up((B + 1) // 2, 128)
    return min(_round_up(batch_tile, 128), half)


def net_forward(x, params, *, batch_tile=2048, matmul_dtype=jnp.float32,
                return_transposed=False):
    """x: (B, shape) float32. params: dict of already-transposed weights/biases.

    Returns (B, n_actions) f32 (or (n_actions, B) if return_transposed=True,
    which skips the final small transpose copy for fused consumers)."""
    w1, b1 = params["w1"], params["b1"]          # (D, H), (1, H)
    B, D = x.shape
    H = w1.shape[1]
    A = params["wa"].shape[1]

    # Sublane padding of the tiny action dim (output rows) and of the
    # contraction dim (16 for bf16's (16,128) min tile, 8 for f32).
    a_pad = _round_up(A, 8)
    d_pad = _round_up(D, 16 if matmul_dtype == jnp.bfloat16 else 8)

    TB = _choose_batch_tile(B, batch_tile)
    B_pad = _round_up(B, TB)

    # Transposed, zero-padded operands (small, one-time XLA ops per call).
    xt = jnp.zeros((d_pad, B_pad), matmul_dtype).at[:D, :B].set(
        x.T.astype(matmul_dtype))
    w1t = jnp.zeros((H, d_pad), matmul_dtype).at[:, :D].set(
        w1.T.astype(matmul_dtype))
    b1t = b1.reshape(H, 1).astype(jnp.float32)
    wht, bht = _fold_heads_transposed(
        params["wv"], params["bv"], params["wa"], params["ba"], a_pad)

    grid = (B_pad // TB,)

    out_t = pl.pallas_call(
        net_kernel,
        out_shape=jax.ShapeDtypeStruct((a_pad, B_pad), jnp.float32),
        grid=grid,
        in_specs=[
            pl.BlockSpec((d_pad, TB), lambda i: (0, i)),   # x^T: tiled over batch lanes
            pl.BlockSpec((H, d_pad), lambda i: (0, 0)),    # W1^T: resident
            pl.BlockSpec((H, 1), lambda i: (0, 0)),        # b1^T: resident
            pl.BlockSpec((a_pad, H), lambda i: (0, 0)),    # folded head W^T: resident
            pl.BlockSpec((a_pad, 1), lambda i: (0, 0)),    # folded head b^T: resident
        ],
        out_specs=pl.BlockSpec((a_pad, TB), lambda i: (0, i)),
        compiler_params=pltpu.CompilerParams(
            dimension_semantics=("parallel",),
        ),
    )(xt, w1t, b1t, wht, bht)

    if return_transposed:
        return out_t[:A, :B]          # (A, B): no transpose copy
    return out_t[:A, :B].T            # (B, A): matches the PyTorch module


# --------------------------------------------------------------------------- #
# Parameters + pure-JAX reference
# --------------------------------------------------------------------------- #
def init_params(key, in_dim, hidden, n_actions):
    """Deterministic synthetic parameters (shapes match the nn.Linear layers).

    PyTorch Linear stores weight as (out, in); we store the transpose (in, out)
    so x @ W + b matches the module."""
    k1, k2, k3, k4, k5, k6 = jax.random.split(key, 6)
    s1 = 1.0 / jnp.sqrt(in_dim)
    s2 = 1.0 / jnp.sqrt(hidden)
    return {
        "w1": jax.random.uniform(k1, (in_dim, hidden), jnp.float32, -s1, s1),
        "b1": jax.random.uniform(k2, (1, hidden), jnp.float32, -s1, s1),
        "wv": jax.random.uniform(k3, (hidden, 1), jnp.float32, -s2, s2),
        "bv": jax.random.uniform(k4, (1, 1), jnp.float32, -s2, s2),
        "wa": jax.random.uniform(k5, (hidden, n_actions), jnp.float32, -s2, s2),
        "ba": jax.random.uniform(k6, (1, n_actions), jnp.float32, -s2, s2),
    }


def reference_forward(x, params):
    """Pure-JAX replica of the PyTorch forward, for correctness checking."""
    h = jnp.maximum(x @ params["w1"] + params["b1"], 0.0)
    val = h @ params["wv"] + params["bv"]
    adv = h @ params["wa"] + params["ba"]
    return val + (adv - adv.mean(axis=1, keepdims=True))


# --------------------------------------------------------------------------- #
# Demo / self-check
# --------------------------------------------------------------------------- #
if __name__ == "__main__":
    # LunarLander-v2: observation dim 8, 4 discrete actions.
    IN_DIM, HIDDEN, N_ACTIONS = 8, 256, 4

    key = jax.random.PRNGKey(0)
    kx, kx2, kp = jax.random.split(key, 3)
    params = init_params(kp, IN_DIM, HIDDEN, N_ACTIONS)

    # --- small batch (single grid step) ---
    B = 8
    x = jax.random.normal(kx, (B, IN_DIM), jnp.float32)
    ref = reference_forward(x, params)

    out_f32 = jax.block_until_ready(net_forward(x, params, matmul_dtype=jnp.float32))
    assert out_f32.shape == (B, N_ACTIONS)
    assert jnp.allclose(out_f32, ref, atol=1e-4, rtol=1e-4), "f32 mismatch vs reference"

    out_bf16 = jax.block_until_ready(net_forward(x, params, matmul_dtype=jnp.bfloat16))
    assert out_bf16.shape == (B, N_ACTIONS)
    assert jnp.allclose(out_bf16, ref, atol=2e-2, rtol=2e-2), "bf16 mismatch vs reference"

    # --- larger batch: exercises batch padding and a 2-step "parallel" grid ---
    B2 = 300
    x2 = jax.random.normal(kx2, (B2, IN_DIM), jnp.float32)
    ref2 = reference_forward(x2, params)
    out2 = jax.block_until_ready(net_forward(x2, params, matmul_dtype=jnp.float32))
    assert out2.shape == (B2, N_ACTIONS)
    assert jnp.allclose(out2, ref2, atol=1e-4, rtol=1e-4), "multi-tile mismatch vs reference"

    # Transposed-output fast path (no final transpose copy).
    out2_t = jax.block_until_ready(
        net_forward(x2, params, matmul_dtype=jnp.float32, return_transposed=True))
    assert out2_t.shape == (N_ACTIONS, B2)
    assert jnp.allclose(out2_t.T, ref2, atol=1e-4, rtol=1e-4), "transposed-output mismatch"

    print("KERNEL_OK")
</pallas_src>

<mosaic_0001>
module attributes {stable_mosaic.version = 11 : i64} {
  func.func @net_kernel(%arg0: i32, %arg1: memref<8x128xf32, #tpu.memory_space<vmem>>, %arg2: memref<256x8xf32, #tpu.memory_space<vmem>>, %arg3: memref<256x1xf32, #tpu.memory_space<vmem>>, %arg4: memref<8x256xf32, #tpu.memory_space<vmem>>, %arg5: memref<8x1xf32, #tpu.memory_space<vmem>>, %arg6: memref<8x128xf32, #tpu.memory_space<vmem>>) attributes {dimension_semantics = [#tpu.dimension_semantics<parallel>], iteration_bounds = array<i64: 1>, scalar_prefetch = 0 : i64, scratch_operands = 0 : i64, tpu.core_type = #tpu.core_type<tc>, window_params = [{transform_indices = @transform_0, window_bounds = array<i64: 8, 128>}, {pipeline_mode = #tpu.pipeline_mode<synchronous>, transform_indices = @transform_1, window_bounds = array<i64: 256, 8>}, {pipeline_mode = #tpu.pipeline_mode<synchronous>, transform_indices = @transform_2, window_bounds = array<i64: 256, 1>}, {pipeline_mode = #tpu.pipeline_mode<synchronous>, transform_indices = @transform_3, window_bounds = array<i64: 8, 256>}, {pipeline_mode = #tpu.pipeline_mode<synchronous>, transform_indices = @transform_4, window_bounds = array<i64: 8, 1>}, {transform_indices = @transform_5, window_bounds = array<i64: 8, 128>}]} {
    %c0 = arith.constant 0 : index
    %c0_0 = arith.constant 0 : index
    %0 = vector.load %arg2[%c0, %c0_0] : memref<256x8xf32, #tpu.memory_space<vmem>>, vector<256x8xf32>
    %c0_1 = arith.constant 0 : index
    %c0_2 = arith.constant 0 : index
    %1 = vector.load %arg1[%c0_1, %c0_2] : memref<8x128xf32, #tpu.memory_space<vmem>>, vector<8x128xf32>
    %cst = arith.constant dense<0.000000e+00> : vector<256x128xf32>
    %2 = tpu.matmul %0, %1, %cst {dimension_numbers = #tpu.dot_dimension_numbers<[1], [0], [0], [1], [0, 0, 1, 1], [], []>} : vector<256x8xf32>, vector<8x128xf32>, vector<256x128xf32> -> vector<256x128xf32>
    %c0_3 = arith.constant 0 : index
    %c0_4 = arith.constant 0 : index
    %3 = vector.load %arg3[%c0_3, %c0_4] : memref<256x1xf32, #tpu.memory_space<vmem>>, vector<256x1xf32>
    %4 = vector.broadcast %3 : vector<256x1xf32> to vector<256x128xf32>
    %5 = arith.addf %2, %4 : vector<256x128xf32>
    %cst_5 = arith.constant 0.000000e+00 : f32
    %6 = vector.broadcast %cst_5 : f32 to vector<256x128xf32>
    %7 = arith.maximumf %5, %6 : vector<256x128xf32>
    %c0_6 = arith.constant 0 : index
    %c0_7 = arith.constant 0 : index
    %8 = vector.load %arg4[%c0_6, %c0_7] : memref<8x256xf32, #tpu.memory_space<vmem>>, vector<8x256xf32>
    %cst_8 = arith.constant dense<0.000000e+00> : vector<8x128xf32>
    %9 = tpu.matmul %8, %7, %cst_8 {dimension_numbers = #tpu.dot_dimension_numbers<[1], [0], [0], [1], [0, 0, 1, 1], [], []>} : vector<8x256xf32>, vector<256x128xf32>, vector<8x128xf32> -> vector<8x128xf32>
    %c0_9 = arith.constant 0 : index
    %c0_10 = arith.constant 0 : index
    %10 = vector.load %arg5[%c0_9, %c0_10] : memref<8x1xf32, #tpu.memory_space<vmem>>, vector<8x1xf32>
    %11 = vector.broadcast %10 : vector<8x1xf32> to vector<8x128xf32>
    %12 = arith.addf %9, %11 : vector<8x128xf32>
    %c0_11 = arith.constant 0 : index
    %c0_12 = arith.constant 0 : index
    %13 = vector.load %arg6[%c0_11, %c0_12] : memref<8x128xf32, #tpu.memory_space<vmem>>, vector<8x128xf32>
    tpu.vector_store %arg6[%c0_11, %c0_12], %12 {strides = array<i32>} : memref<8x128xf32, #tpu.memory_space<vmem>>, vector<8x128xf32>,
    return
  }
  func.func @transform_0(%arg0: i32) -> (i32, i32) {
    %c0_i32 = arith.constant 0 : i32
    %c0_i32_0 = arith.constant 0 : i32
    return %c0_i32, %arg0 : i32, i32
  }
  func.func @transform_1(%arg0: i32) -> (i32, i32) {
    %c0_i32 = arith.constant 0 : i32
    %c0_i32_0 = arith.constant 0 : i32
    %c0_i32_1 = arith.constant 0 : i32
    return %c0_i32, %c0_i32_0 : i32, i32
  }
  func.func @transform_2(%arg0: i32) -> (i32, i32) {
    %c0_i32 = arith.constant 0 : i32
    %c0_i32_0 = arith.constant 0 : i32
    %c0_i32_1 = arith.constant 0 : i32
    return %c0_i32, %c0_i32_0 : i32, i32
  }
  func.func @transform_3(%arg0: i32) -> (i32, i32) {
    %c0_i32 = arith.constant 0 : i32
    %c0_i32_0 = arith.constant 0 : i32
    %c0_i32_1 = arith.constant 0 : i32
    return %c0_i32, %c0_i32_0 : i32, i32
  }
  func.func @transform_4(%arg0: i32) -> (i32, i32) {
    %c0_i32 = arith.constant 0 : i32
    %c0_i32_0 = arith.constant 0 : i32
    %c0_i32_1 = arith.constant 0 : i32
    return %c0_i32, %c0_i32_0 : i32, i32
  }
  func.func @transform_5(%arg0: i32) -> (i32, i32) {
    %c0_i32 = arith.constant 0 : i32
    %c0_i32_0 = arith.constant 0 : i32
    return %c0_i32, %arg0 : i32, i32
  }
}

</mosaic_0001>

<llo_original>
// kernel: tpu_custom_call.1
$region0: #{tpu_custom_call.1}
  #allocation0 [shape = 'u32[]', space=smem, size = 0x4, offset = 0x4, fixed_abs, tag = 'smem constant byte address 0x4 - core index']
  #allocation1 [shape = 'u32[72,128]{1,0:T(1,128)}', space=vmem, size = 0x9000, scoped, tag = 'internal scratch']
  %s0 = inlined_call_operand.vmem [shape: f32[8,128], index: 0, kind: input, shape index: {}]
  %s1 = inlined_call_operand.vmem [shape: f32[256,8], index: 1, kind: input, shape index: {}]
  %s2 = inlined_call_operand.vmem [shape: f32[256,1], index: 2, kind: input, shape index: {}]
  %s3 = inlined_call_operand.vmem [shape: f32[8,256], index: 3, kind: input, shape index: {}]
  %s4 = inlined_call_operand.vmem [shape: f32[8,1], index: 4, kind: input, shape index: {}]
  %s5 = inlined_call_operand.hbm [shape: f32[8,128], index: 5, kind: output, shape index: {}]
  %s6 = sld [smem:[#allocation0]]
  $region30: #{tpu_custom_call.1} parent=0
    _
  %s8 = ssub.s32 1, %s6
  %s9 = scalar_select 0, %s8, %s6
  $region1: #{tpu_custom_call.1} parent=0
    #allocation2 [shape = 'u8[4096]{0}', space=vmem, size = 0x1000, scoped, tag = 'output window, operand 0, single buffered']
    #allocation3 [shape = 's32[1]{0}', space=sflag, size = 0x4, scoped, tag = 'scoped memory for tpu_custom_call.1']
    %10 = vsyncpa [#allocation3], 0
    // Predicated region
    $region2: #{tpu_custom_call.1} parent=1 // pred_check
      _
    $region3: #{tpu_custom_call.1} parent=1 // pred_check_branch
      %12 = sbr.rel (0) target = $region5
    $region4: #{tpu_custom_call.1} parent=1 // pred_region
      _
    $region5: #{tpu_custom_call.1} parent=1 // pred_fallthru
      _
    // Predicated region
    $region6: #{tpu_custom_call.1} parent=1 // pred_check
      _
    $region7: #{tpu_custom_call.1} parent=1 // pred_check_branch
      %14 = sbr.rel (0) target = $region9
    $region8: #{tpu_custom_call.1} parent=1 // pred_region
      _
    $region9: #{tpu_custom_call.1} parent=1 // pred_fallthru
      _
    // Predicated region
    $region10: #{tpu_custom_call.1} parent=1 // pred_check
      _
    $region11: #{tpu_custom_call.1} parent=1 // pred_check_branch
      %16 = sbr.rel (0) target = $region13
    $region12: #{tpu_custom_call.1} parent=1 // pred_region
      _
    $region13: #{tpu_custom_call.1} parent=1 // pred_fallthru
      _
    // Predicated region
    $region14: #{tpu_custom_call.1} parent=1 // pred_check
      _
    $region15: #{tpu_custom_call.1} parent=1 // pred_check_branch
      %18 = sbr.rel (0) target = $region17
    $region16: #{tpu_custom_call.1} parent=1 // pred_region
      _
    $region17: #{tpu_custom_call.1} parent=1 // pred_fallthru
      _
    // Predicated region
    $region18: #{tpu_custom_call.1} parent=1 // pred_check
      _
    $region19: #{tpu_custom_call.1} parent=1 // pred_check_branch
      %20 = sbr.rel (0) target = $region21
    $region20: #{tpu_custom_call.1} parent=1 // pred_region
      _
    $region21: #{tpu_custom_call.1} parent=1 // pred_fallthru
      _
    %v21 = vld [vmem:[%s1] sm:$0xff]
    %v22 = vld [vmem:[%s1 + $0x8] sm:$0xff]
    %v23 = vld [vmem:[%s1 + $0x10] sm:$0xff]
    %v24 = vld [vmem:[%s1 + $0x18] sm:$0xff]
    %v25 = vld [vmem:[%s1 + $0x20] sm:$0xff]
    %v26 = vld [vmem:[%s1 + $0x28] sm:$0xff]
    %v27 = vld [vmem:[%s1 + $0x30] sm:$0xff]
    %v28 = vld [vmem:[%s1 + $0x38] sm:$0xff]
    %v29 = vld [vmem:[%s1 + $0x40] sm:$0xff]
    %v30 = vld [vmem:[%s1 + $0x48] sm:$0xff]
    %v31 = vld [vmem:[%s1 + $0x50] sm:$0xff]
    %v32 = vld [vmem:[%s1 + $0x58] sm:$0xff]
    %v33 = vld [vmem:[%s1 + $0x60] sm:$0xff]
    %v34 = vld [vmem:[%s1 + $0x68] sm:$0xff]
    %v35 = vld [vmem:[%s1 + $0x70] sm:$0xff]
    %v36 = vld [vmem:[%s1 + $0x78] sm:$0xff]
    %v37 = vld [vmem:[%s1 + $0x80] sm:$0xff]
    %v38 = vld [vmem:[%s1 + $0x88] sm:$0xff]
    %v39 = vld [vmem:[%s1 + $0x90] sm:$0xff]
    %v40 = vld [vmem:[%s1 + $0x98] sm:$0xff]
    %v41 = vld [vmem:[%s1 + $0xa0] sm:$0xff]
    %v42 = vld [vmem:[%s1 + $0xa8] sm:$0xff]
    %v43 = vld [vmem:[%s1 + $0xb0] sm:$0xff]
    %v44 = vld [vmem:[%s1 + $0xb8] sm:$0xff]
    %v45 = vld [vmem:[%s1 + $0xc0] sm:$0xff]
    %v46 = vld [vmem:[%s1 + $0xc8] sm:$0xff]
    %v47 = vld [vmem:[%s1 + $0xd0] sm:$0xff]
    %v48 = vld [vmem:[%s1 + $0xd8] sm:$0xff]
    %v49 = vld [vmem:[%s1 + $0xe0] sm:$0xff]
    %v50 = vld [vmem:[%s1 + $0xe8] sm:$0xff]
    %v51 = vld [vmem:[%s1 + $0xf0] sm:$0xff]
    %v52 = vld [vmem:[%s1 + $0xf8] sm:$0xff]
    %v53 = vld [vmem:[%s0] sm:$0xff]
    %v54 = vld [vmem:[%s2] sm:$0xff]
    %v55 = vld [vmem:[%s2 + $0x8] sm:$0xff]
    %v56 = vld [vmem:[%s2 + $0x10] sm:$0xff]
    %v57 = vld [vmem:[%s2 + $0x18] sm:$0xff]
    %v58 = vld [vmem:[%s2 + $0x20] sm:$0xff]
    %v59 = vld [vmem:[%s2 + $0x28] sm:$0xff]
    %v60 = vld [vmem:[%s2 + $0x30] sm:$0xff]
    %v61 = vld [vmem:[%s2 + $0x38] sm:$0xff]
    %v62 = vld [vmem:[%s2 + $0x40] sm:$0xff]
    %v63 = vld [vmem:[%s2 + $0x48] sm:$0xff]
    %v64 = vld [vmem:[%s2 + $0x50] sm:$0xff]
    %v65 = vld [vmem:[%s2 + $0x58] sm:$0xff]
    %v66 = vld [vmem:[%s2 + $0x60] sm:$0xff]
    %v67 = vld [vmem:[%s2 + $0x68] sm:$0xff]
    %v68 = vld [vmem:[%s2 + $0x70] sm:$0xff]
    %v69 = vld [vmem:[%s2 + $0x78] sm:$0xff]
    %v70 = vld [vmem:[%s2 + $0x80] sm:$0xff]
    %v71 = vld [vmem:[%s2 + $0x88] sm:$0xff]
    %v72 = vld [vmem:[%s2 + $0x90] sm:$0xff]
    %v73 = vld [vmem:[%s2 + $0x98] sm:$0xff]
    %v74 = vld [vmem:[%s2 + $0xa0] sm:$0xff]
    %v75 = vld [vmem:[%s2 + $0xa8] sm:$0xff]
    %v76 = vld [vmem:[%s2 + $0xb0] sm:$0xff]
    %v77 = vld [vmem:[%s2 + $0xb8] sm:$0xff]
    %v78 = vld [vmem:[%s2 + $0xc0] sm:$0xff]
    %v79 = vld [vmem:[%s2 + $0xc8] sm:$0xff]
    %v80 = vld [vmem:[%s2 + $0xd0] sm:$0xff]
    %v81 = vld [vmem:[%s2 + $0xd8] sm:$0xff]
    %v82 = vld [vmem:[%s2 + $0xe0] sm:$0xff]
    %v83 = vld [vmem:[%s2 + $0xe8] sm:$0xff]
    %v84 = vld [vmem:[%s2 + $0xf0] sm:$0xff]
    %v85 = vld [vmem:[%s2 + $0xf8] sm:$0xff]
    %87 = vset.pattern.permute.xlu0 0
    %88 = vperm.xlu0 %87, %v54
    %v89 = vpop.permute.xlu0 %88
    %92 = vset.pattern.permute.xlu0 0
    %93 = vperm.xlu0 %92, %v55
    %v94 = vpop.permute.xlu0 %93
    %97 = vset.pattern.permute.xlu0 0
    %98 = vperm.xlu0 %97, %v56
    %v99 = vpop.permute.xlu0 %98
    %102 = vset.pattern.permute.xlu0 0
    %103 = vperm.xlu0 %102, %v57
    %v104 = vpop.permute.xlu0 %103
    %107 = vset.pattern.permute.xlu0 0
    %108 = vperm.xlu0 %107, %v58
    %v109 = vpop.permute.xlu0 %108
    %112 = vset.pattern.permute.xlu0 0
    %113 = vperm.xlu0 %112, %v59
    %v114 = vpop.permute.xlu0 %113
    %117 = vset.pattern.permute.xlu0 0
    %118 = vperm.xlu0 %117, %v60
    %v119 = vpop.permute.xlu0 %118
    %122 = vset.pattern.permute.xlu0 0
    %123 = vperm.xlu0 %122, %v61
    %v124 = vpop.permute.xlu0 %123
    %127 = vset.pattern.permute.xlu0 0
    %128 = vperm.xlu0 %127, %v62
    %v129 = vpop.permute.xlu0 %128
    %132 = vset.pattern.permute.xlu0 0
    %133 = vperm.xlu0 %132, %v63
    %v134 = vpop.permute.xlu0 %133
    %137 = vset.pattern.permute.xlu0 0
    %138 = vperm.xlu0 %137, %v64
    %v139 = vpop.permute.xlu0 %138
    %142 = vset.pattern.permute.xlu0 0
    %143 = vperm.xlu0 %142, %v65
    %v144 = vpop.permute.xlu0 %143
    %147 = vset.pattern.permute.xlu0 0
    %148 = vperm.xlu0 %147, %v66
    %v149 = vpop.permute.xlu0 %148
    %152 = vset.pattern.permute.xlu0 0
    %153 = vperm.xlu0 %152, %v67
    %v154 = vpop.permute.xlu0 %153
    %157 = vset.pattern.permute.xlu0 0
    %158 = vperm.xlu0 %157, %v68
    %v159 = vpop.permute.xlu0 %158
    %162 = vset.pattern.permute.xlu0 0
    %163 = vperm.xlu0 %162, %v69
    %v164 = vpop.permute.xlu0 %163
    %167 = vset.pattern.permute.xlu0 0
    %168 = vperm.xlu0 %167, %v70
    %v169 = vpop.permute.xlu0 %168
    %172 = vset.pattern.permute.xlu0 0
    %173 = vperm.xlu0 %172, %v71
    %v174 = vpop.permute.xlu0 %173
    %177 = vset.pattern.permute.xlu0 0
    %178 = vperm.xlu0 %177, %v72
    %v179 = vpop.permute.xlu0 %178
    %182 = vset.pattern.permute.xlu0 0
    %183 = vperm.xlu0 %182, %v73
    %v184 = vpop.permute.xlu0 %183
    %187 = vset.pattern.permute.xlu0 0
    %188 = vperm.xlu0 %187, %v74
    %v189 = vpop.permute.xlu0 %188
    %192 = vset.pattern.permute.xlu0 0
    %193 = vperm.xlu0 %192, %v75
    %v194 = vpop.permute.xlu0 %193
    %197 = vset.pattern.permute.xlu0 0
    %198 = vperm.xlu0 %197, %v76
    %v199 = vpop.permute.xlu0 %198
    %202 = vset.pattern.permute.xlu0 0
    %203 = vperm.xlu0 %202, %v77
    %v204 = vpop.permute.xlu0 %203
    %207 = vset.pattern.permute.xlu0 0
    %208 = vperm.xlu0 %207, %v78
    %v209 = vpop.permute.xlu0 %208
    %212 = vset.pattern.permute.xlu0 0
    %213 = vperm.xlu0 %212, %v79
    %v214 = vpop.permute.xlu0 %213
    %217 = vset.pattern.permute.xlu0 0
    %218 = vperm.xlu0 %217, %v80
    %v219 = vpop.permute.xlu0 %218
    %222 = vset.pattern.permute.xlu0 0
    %223 = vperm.xlu0 %222, %v81
    %v224 = vpop.permute.xlu0 %223
    %227 = vset.pattern.permute.xlu0 0
    %228 = vperm.xlu0 %227, %v82
    %v229 = vpop.permute.xlu0 %228
    %232 = vset.pattern.permute.xlu0 0
    %233 = vperm.xlu0 %232, %v83
    %v234 = vpop.permute.xlu0 %233
    %237 = vset.pattern.permute.xlu0 0
    %238 = vperm.xlu0 %237, %v84
    %v239 = vpop.permute.xlu0 %238
    %242 = vset.pattern.permute.xlu0 0
    %243 = vperm.xlu0 %242, %v85
    %v244 = vpop.permute.xlu0 %243
    %vm246 = vcmask 64512
    %v248 = vsel %vm246, %v21, 0
    %v251 = vsel %vm246, %v22, 0
    %v254 = vsel %vm246, %v23, 0
    %v257 = vsel %vm246, %v24, 0
    %v260 = vsel %vm246, %v25, 0
    %v263 = vsel %vm246, %v26, 0
    %v266 = vsel %vm246, %v27, 0
    %v269 = vsel %vm246, %v28, 0
    %v272 = vsel %vm246, %v29, 0
    %v275 = vsel %vm246, %v30, 0
    %v278 = vsel %vm246, %v31, 0
    %v281 = vsel %vm246, %v32, 0
    %v284 = vsel %vm246, %v33, 0
    %v287 = vsel %vm246, %v34, 0
    %v290 = vsel %vm246, %v35, 0
    %v293 = vsel %vm246, %v36, 0
    %v296 = vsel %vm246, %v37, 0
    %v299 = vsel %vm246, %v38, 0
    %v302 = vsel %vm246, %v39, 0
    %v305 = vsel %vm246, %v40, 0
    %v308 = vsel %vm246, %v41, 0
    %v311 = vsel %vm246, %v42, 0
    %v314 = vsel %vm246, %v43, 0
    %v317 = vsel %vm246, %v44, 0
    %v320 = vsel %vm246, %v45, 0
    %v323 = vsel %vm246, %v46, 0
    %v326 = vsel %vm246, %v47, 0
    %v329 = vsel %vm246, %v48, 0
    %v332 = vsel %vm246, %v49, 0
    %v335 = vsel %vm246, %v50, 0
    %v338 = vsel %vm246, %v51, 0
    %v341 = vsel %vm246, %v52, 0
    %343 = vmatpush.msra.mxu0 0.0
    %344 = vmatpush.msra.mxu0 0.0
    %345 = vmatpush.msra.mxu0 0.0
    %346 = vmatpush.msra.mxu0 0.0
    %347 = vmatpush.msra.mxu0 0.0
    %348 = vmatpush.msra.mxu0 0.0
    %349 = vmatpush.msra.mxu0 0.0
    %350 = vmatpush.msra.mxu0 0.0
    %351 = vmatpush.msra.mxu0 0.0
    %352 = vmatpush.msra.mxu0 0.0
    %353 = vmatpush.msra.mxu0 0.0
    %354 = vmatpush.msra.mxu0 0.0
    %355 = vmatpush.msra.mxu0 0.0
    %356 = vmatpush.msra.mxu0 0.0
    %357 = vmatpush.msra.mxu0 0.0
    %358 = vmatpush.msra.mxu0 %v53
    %359 = vmatmul.f32.gmra.mxu0 %v248
    %v360 = vpop.f32.mrf.mxu0
    %v361 = vadd.f32 %v89, %v360
    %362 = vmatmul.f32.gmra.mxu0 %v251
    %v363 = vpop.f32.mrf.mxu0
    %v364 = vadd.f32 %v94, %v363
    %365 = vmatmul.f32.gmra.mxu0 %v254
    %v366 = vpop.f32.mrf.mxu0
    %v367 = vadd.f32 %v99, %v366
    %368 = vmatmul.f32.gmra.mxu0 %v257
    %v369 = vpop.f32.mrf.mxu0
    %v370 = vadd.f32 %v104, %v369
    %371 = vmatmul.f32.gmra.mxu0 %v260
    %v372 = vpop.f32.mrf.mxu0
    %v373 = vadd.f32 %v109, %v372
    %374 = vmatmul.f32.gmra.mxu0 %v263
    %v375 = vpop.f32.mrf.mxu0
    %v376 = vadd.f32 %v114, %v375
    %377 = vmatmul.f32.gmra.mxu0 %v266
    %v378 = vpop.f32.mrf.mxu0
    %v379 = vadd.f32 %v119, %v378
    %380 = vmatmul.f32.gmra.mxu0 %v269
    %v381 = vpop.f32.mrf.mxu0
    %v382 = vadd.f32 %v124, %v381
    %383 = vmatmul.f32.gmra.mxu0 %v272
    %v384 = vpop.f32.mrf.mxu0
    %v385 = vadd.f32 %v129, %v384
    %386 = vmatmul.f32.gmra.mxu0 %v275
    %v387 = vpop.f32.mrf.mxu0
    %v388 = vadd.f32 %v134, %v387
    %389 = vmatmul.f32.gmra.mxu0 %v278
    %v390 = vpop.f32.mrf.mxu0
    %v391 = vadd.f32 %v139, %v390
    %392 = vmatmul.f32.gmra.mxu0 %v281
    %v393 = vpop.f32.mrf.mxu0
    %v394 = vadd.f32 %v144, %v393
    %395 = vmatmul.f32.gmra.mxu0 %v284
    %v396 = vpop.f32.mrf.mxu0
    %v397 = vadd.f32 %v149, %v396
    %398 = vmatmul.f32.gmra.mxu0 %v287
    %v399 = vpop.f32.mrf.mxu0
    %v400 = vadd.f32 %v154, %v399
    %401 = vmatmul.f32.gmra.mxu0 %v290
    %v402 = vpop.f32.mrf.mxu0
    %v403 = vadd.f32 %v159, %v402
    %404 = vmatmul.f32.gmra.mxu0 %v293
    %v405 = vpop.f32.mrf.mxu0
    %v406 = vadd.f32 %v164, %v405
    %407 = vmatmul.f32.gmra.mxu0 %v296
    %v408 = vpop.f32.mrf.mxu0
    %v409 = vadd.f32 %v169, %v408
    %410 = vmatmul.f32.gmra.mxu0 %v299
    %v411 = vpop.f32.mrf.mxu0
    %v412 = vadd.f32 %v174, %v411
    %413 = vmatmul.f32.gmra.mxu0 %v302
    %v414 = vpop.f32.mrf.mxu0
    %v415 = vadd.f32 %v179, %v414
    %416 = vmatmul.f32.gmra.mxu0 %v305
    %v417 = vpop.f32.mrf.mxu0
    %v418 = vadd.f32 %v184, %v417
    %419 = vmatmul.f32.gmra.mxu0 %v308
    %v420 = vpop.f32.mrf.mxu0
    %v421 = vadd.f32 %v189, %v420
    %422 = vmatmul.f32.gmra.mxu0 %v311
    %v423 = vpop.f32.mrf.mxu0
    %v424 = vadd.f32 %v194, %v423
    %425 = vmatmul.f32.gmra.mxu0 %v314
    %v426 = vpop.f32.mrf.mxu0
    %v427 = vadd.f32 %v199, %v426
    %428 = vmatmul.f32.gmra.mxu0 %v317
    %v429 = vpop.f32.mrf.mxu0
    %v430 = vadd.f32 %v204, %v429
    %431 = vmatmul.f32.gmra.mxu0 %v320
    %v432 = vpop.f32.mrf.mxu0
    %v433 = vadd.f32 %v209, %v432
    %434 = vmatmul.f32.gmra.mxu0 %v323
    %v435 = vpop.f32.mrf.mxu0
    %v436 = vadd.f32 %v214, %v435
    %437 = vmatmul.f32.gmra.mxu0 %v326
    %v438 = vpop.f32.mrf.mxu0
    %v439 = vadd.f32 %v219, %v438
    %440 = vmatmul.f32.gmra.mxu0 %v329
    %v441 = vpop.f32.mrf.mxu0
    %v442 = vadd.f32 %v224, %v441
    %443 = vmatmul.f32.gmra.mxu0 %v332
    %v444 = vpop.f32.mrf.mxu0
    %v445 = vadd.f32 %v229, %v444
    %446 = vmatmul.f32.gmra.mxu0 %v335
    %v447 = vpop.f32.mrf.mxu0
    %v448 = vadd.f32 %v234, %v447
    %449 = vmatmul.f32.gmra.mxu0 %v338
    %v450 = vpop.f32.mrf.mxu0
    %v451 = vadd.f32 %v239, %v450
    %452 = vmatmul.f32.gmra.mxu0 %v341
    %v453 = vpop.f32.mrf.mxu0
    %v454 = vadd.f32 %v244, %v453
    %455 = vdwg.mxu0
    %v456 = vmax.f32 %v361, 0.0
    %v457 = vmax.f32 %v364, 0.0
    %v458 = vmax.f32 %v367, 0.0
    %v459 = vmax.f32 %v370, 0.0
    %v460 = vmax.f32 %v373, 0.0
    %v461 = vmax.f32 %v376, 0.0
    %v462 = vmax.f32 %v379, 0.0
    %v463 = vmax.f32 %v382, 0.0
    %v464 = vmax.f32 %v385, 0.0
    %v465 = vmax.f32 %v388, 0.0
    %v466 = vmax.f32 %v391, 0.0
    %v467 = vmax.f32 %v394, 0.0
    %v468 = vmax.f32 %v397, 0.0
    %v469 = vmax.f32 %v400, 0.0
    %v470 = vmax.f32 %v403, 0.0
    %v471 = vmax.f32 %v406, 0.0
    %v472 = vmax.f32 %v409, 0.0
    %v473 = vmax.f32 %v412, 0.0
    %v474 = vmax.f32 %v415, 0.0
    %v475 = vmax.f32 %v418, 0.0
    %v476 = vmax.f32 %v421, 0.0
    %v477 = vmax.f32 %v424, 0.0
    %v478 = vmax.f32 %v427, 0.0
    %v479 = vmax.f32 %v430, 0.0
    %v480 = vmax.f32 %v433, 0.0
    %v481 = vmax.f32 %v436, 0.0
    %v482 = vmax.f32 %v439, 0.0
    %v483 = vmax.f32 %v442, 0.0
    %v484 = vmax.f32 %v445, 0.0
    %v485 = vmax.f32 %v448, 0.0
    %v486 = vmax.f32 %v451, 0.0
    %v487 = vmax.f32 %v454, 0.0
    %v488 = vld [vmem:[%s3] sm:$0xff]
    %v489 = vld [vmem:[%s3 + $0x8] sm:$0xff]
    %v490 = vld [vmem:[%s4] sm:$0xff]
    %492 = vset.pattern.permute.xlu0 0
    %493 = vperm.xlu0 %492, %v490
    %v494 = vpop.permute.xlu0 %493
    %496 = vmatpush.msra.mxu0 %v471
    %497 = vmatpush.msra.mxu0 %v470
    %498 = vmatpush.msra.mxu0 %v469
    %499 = vmatpush.msra.mxu0 %v468
    %500 = vmatpush.msra.mxu0 %v467
    %501 = vmatpush.msra.mxu0 %v466
    %502 = vmatpush.msra.mxu0 %v465
    %503 = vmatpush.msra.mxu0 %v464
    %504 = vmatpush.msra.mxu0 %v463
    %505 = vmatpush.msra.mxu0 %v462
    %506 = vmatpush.msra.mxu0 %v461
    %507 = vmatpush.msra.mxu0 %v460
    %508 = vmatpush.msra.mxu0 %v459
    %509 = vmatpush.msra.mxu0 %v458
    %510 = vmatpush.msra.mxu0 %v457
    %511 = vmatpush.msra.mxu0 %v456
    %512 = vmatmul.f32.gmra.mxu0 %v488
    %v513 = vpop.f32.mrf.mxu0
    %v514 = vadd.f32 %v494, %v513
    %515 = vdwg.mxu0
    %516 = vmatpush.msra.mxu0 %v487
    %517 = vmatpush.msra.mxu0 %v486
    %518 = vmatpush.msra.mxu0 %v485
    %519 = vmatpush.msra.mxu0 %v484
    %520 = vmatpush.msra.mxu0 %v483
    %521 = vmatpush.msra.mxu0 %v482
    %522 = vmatpush.msra.mxu0 %v481
    %523 = vmatpush.msra.mxu0 %v480
    %524 = vmatpush.msra.mxu0 %v479
    %525 = vmatpush.msra.mxu0 %v478
    %526 = vmatpush.msra.mxu0 %v477
    %527 = vmatpush.msra.mxu0 %v476
    %528 = vmatpush.msra.mxu0 %v475
    %529 = vmatpush.msra.mxu0 %v474
    %530 = vmatpush.msra.mxu0 %v473
    %531 = vmatpush.msra.mxu0 %v472
    %532 = vmatmul.f32.gmra.mxu0 %v489
    %v533 = vpop.f32.mrf.mxu0
    %v534 = vadd.f32 %v514, %v533
    %535 = vdwg.mxu0
    %536 = vst [vmem:[#allocation2] sm:$0xff] %v534
    // Predicated region
    $region22: #{tpu_custom_call.1} parent=1 // pred_check
      _
    $region23: #{tpu_custom_call.1} parent=1 // pred_check_branch
      %538 = sbr.rel (0) target = $region25
    $region24: #{tpu_custom_call.1} parent=1 // pred_region
      %540 = vsyncadd [#allocation3], 0
      %s542 = sshll.u32 [#allocation2], 4
      %s543 = int_to_ptr.vmem [resolvable:$true] %s542
      %s544 = sshll.u32 %s5, 4
      %s545 = int_to_ptr.hbm [resolvable:$true] %s544
      %547 = dma.vmem_to_hbm [thread:$0]  %s543, 128, %s545, [#allocation3]
    $region25: #{tpu_custom_call.1} parent=1 // pred_fallthru
      _
    // Predicated region
    $region26: #{tpu_custom_call.1} parent=1 // pred_check
      _
    $region27: #{tpu_custom_call.1} parent=1 // pred_check_branch
      %549 = sbr.rel (0) target = $region29
    $region28: #{tpu_custom_call.1} parent=1 // pred_region
      %551 = dma.done [#allocation3], 128
    $region29: #{tpu_custom_call.1} parent=1 // pred_fallthru
      _
    %552 = vsyncpa [#allocation3], 1

</llo_original>
